<compile_context>
chip_gen: v6e
topology: v6e:2x2x1
jax: 0.10.0
libtpu: 0.0.40
codegen_flags: <defaults>
</compile_context>

<pallas_src>
import functools

import jax
import jax.numpy as jnp
from jax import lax
from jax.experimental import pallas as pl
from jax.experimental.pallas import tpu as pltpu


def _fused_embed_kernel(xg_ref, xe_ref, w_ref, b_ref, gamma_ref, beta_ref,
                        pos_ref, cls_ref, o_ref, *, eps, n_l):
    l = pl.program_id(1)
    tl = xg_ref.shape[1]

    # K-fused projection: concat gene/expr rows along lanes -> single K=2D MXU pass.
    x = jnp.concatenate([xg_ref[0], xe_ref[0]], axis=-1)             # (tl, 2D) compute dtype
    h = jnp.dot(x, w_ref[...], preferred_element_type=jnp.float32)   # (tl, D)  f32 accumulate
    h = h + b_ref[...]                                                # combined bias bg + be

    # LayerNorm in f32.
    mean = jnp.mean(h, axis=-1, keepdims=True)
    c = h - mean
    var = jnp.mean(c * c, axis=-1, keepdims=True)
    inv = lax.rsqrt(var + eps)                                        # EUP slot
    y = c * inv * gamma_ref[...] + beta_ref[...]

    # Post-LN positional add: slice the VMEM-resident (L_pad, D) table (no HBM refetch).
    if n_l == 1:
        pos = pos_ref[...]
    else:
        start = pl.multiple_of(l * tl, tl)
        pos = pos_ref[pl.ds(start, tl), :]
    y = y + pos

    # CLS extras (condition + library) on the global row 0 only.
    row_is_zero = lax.broadcasted_iota(jnp.int32, (tl, 1), 0) == 0
    if n_l > 1:
        row_is_zero = jnp.logical_and(row_is_zero, l == 0)
    y = y + jnp.where(row_is_zero, cls_ref[0], 0.0)

    o_ref[0] = y.astype(o_ref.dtype)


def _fused_forward(xg, xe, w_stack, bias, gamma, beta, pos, cls_extra,
                   *, tl, eps, out_dtype):
    B, L, D = xg.shape
    n_l = pl.cdiv(L, tl)
    L_pad = pos.shape[0]
    assert L_pad == n_l * tl

    in_b = xg.dtype.itemsize
    w_b = w_stack.dtype.itemsize
    out_b = jnp.dtype(out_dtype).itemsize
    tokens = B * L

    flops = 2 * tokens * (2 * D) * D + 10 * tokens * D
    bytes_accessed = (2 * tokens * D * in_b            # xg, xe reads
                      + 2 * D * D * w_b                # stacked weights (read once)
                      + tokens * D * out_b             # output write
                      + L_pad * D * 4                  # resident positional table
                      + B * D * 4 + 3 * D * 4)         # cls extras + bias/gamma/beta

    # VMEM footprint: resident weights + pos, double-buffered activation/output tiles.
    tile = tl * D
    vmem_needed = (2 * (2 * D * D * w_b)
                   + 2 * (L_pad * D * 4)
                   + 2 * (2 * tile * in_b)
                   + 2 * (tile * out_b)
                   + 2 * (5 * D * 4))
    vmem_limit = min(max(int(vmem_needed * 1.25) + (8 << 20), 16 << 20), 128 << 20)

    return pl.pallas_call(
        functools.partial(_fused_embed_kernel, eps=eps, n_l=n_l),
        out_shape=jax.ShapeDtypeStruct((B, L, D), out_dtype),
        grid_spec=pltpu.PrefetchScalarGridSpec(
            num_scalar_prefetch=0,
            grid=(B, n_l),
            in_specs=[
                pl.BlockSpec((1, tl, D), lambda b, l: (b, l, 0)),    # gene-emb rows (bf16)
                pl.BlockSpec((1, tl, D), lambda b, l: (b, l, 0)),    # expr-emb rows (bf16)
                pl.BlockSpec((2 * D, D), lambda b, l: (0, 0)),       # [Wg^T ; We^T] resident
                pl.BlockSpec((1, D), lambda b, l: (0, 0)),           # bg + be        (f32)
                pl.BlockSpec((1, D), lambda b, l: (0, 0)),           # gamma          (f32)
                pl.BlockSpec((1, D), lambda b, l: (0, 0)),           # beta           (f32)
                pl.BlockSpec((L_pad, D), lambda b, l: (0, 0)),       # pos table, resident
                pl.BlockSpec((1, 1, D), lambda b, l: (b, 0, 0)),     # cls extra per batch
            ],
            out_specs=pl.BlockSpec((1, tl, D), lambda b, l: (b, l, 0)),
        ),
        compiler_params=pltpu.CompilerParams(
            dimension_semantics=("parallel", "parallel"),
            vmem_limit_bytes=vmem_limit,
        ),
        cost_estimate=pl.CostEstimate(
            flops=flops, transcendentals=tokens, bytes_accessed=bytes_accessed),
    )(xg, xe, w_stack, bias, gamma, beta, pos, cls_extra)


@functools.partial(jax.jit,
                   static_argnames=("use_positional", "eps", "tl", "compute_dtype"))
def token_embedding_forward(params, gene_ids, expression_tokens,
                            condition_tokens, library_size,
                            *, use_positional=True, eps=1e-5, tl=512,
                            compute_dtype=jnp.bfloat16):
    """Pallas-backed equivalent of TokenEmbeddingLayer.forward."""
    B, L = gene_ids.shape
    D = params["gene_emb"].shape[1]
    out_dtype = params["gene_emb"].dtype

    # TODO(synk): large-vocab embedding gathers stay XLA gathers (would need manual DMA gather).
    g_emb = jnp.take(params["gene_emb"], gene_ids, axis=0).astype(compute_dtype)
    e_emb = jnp.take(params["expr_emb"], expression_tokens, axis=0).astype(compute_dtype)

    # Stack the two DxD projections along K so the kernel does one K=2D MXU pass.
    w_stack = jnp.concatenate(
        [params["proj_gene_w_t"], params["proj_expr_w_t"]], axis=0).astype(compute_dtype)
    bias = (params["proj_gene_b"] + params["proj_expr_b"]).astype(jnp.float32).reshape(1, D)
    gamma = params["ln_gamma"].astype(jnp.float32).reshape(1, D)
    beta = params["ln_beta"].astype(jnp.float32).reshape(1, D)

    # L tile: never crosses a batch boundary; multiple of 8 whenever partial tiles can occur.
    if L <= tl:
        tl_eff = L
    else:
        tl_eff = max(8, (tl // 8) * 8)
    n_l = pl.cdiv(L, tl_eff)
    L_pad = n_l * tl_eff

    if use_positional:
        pos = params["pos_emb"][:L].astype(jnp.float32)
    else:
        pos = jnp.zeros((L, D), jnp.float32)
    if L_pad != L:
        pos = jnp.pad(pos, ((0, L_pad - L), (0, 0)))   # tiny (L,D)-scale pad only

    cls_extra = jnp.take(params["lib_emb"], library_size, axis=0)       # (B, D)
    if params.get("cond_emb") is not None:
        if condition_tokens is None:
            c_emb = jnp.zeros((B, D), cls_extra.dtype)
        else:
            c_emb = jnp.take(params["cond_emb"], condition_tokens, axis=0)
        cls_extra = cls_extra + c_emb
    cls_extra = cls_extra.astype(jnp.float32).reshape(B, 1, D)

    return _fused_forward(g_emb, e_emb, w_stack, bias, gamma, beta, pos,
                          cls_extra, tl=tl_eff, eps=eps, out_dtype=out_dtype)


def _reference_forward(params, gene_ids, expression_tokens, condition_tokens,
                       library_size, *, use_positional=True, eps=1e-5):
    B, L = gene_ids.shape
    g = params["gene_emb"][gene_ids]
    e = params["expr_emb"][expression_tokens]
    gp = g @ params["proj_gene_w_t"] + params["proj_gene_b"]
    ep = e @ params["proj_expr_w_t"] + params["proj_expr_b"]
    h = gp + ep
    mu = h.mean(-1, keepdims=True)
    var = ((h - mu) ** 2).mean(-1, keepdims=True)
    h = (h - mu) / jnp.sqrt(var + eps) * params["ln_gamma"] + params["ln_beta"]
    if use_positional:
        h = h + params["pos_emb"][jnp.arange(L)][None, :, :]
    cls = h[:, 0, :]
    if params.get("cond_emb") is not None:
        c = (jnp.zeros((B, h.shape[-1]), h.dtype) if condition_tokens is None
             else params["cond_emb"][condition_tokens])
        cls = cls + c
    cls = cls + params["lib_emb"][library_size]
    return jnp.concatenate([cls[:, None, :], h[:, 1:, :]], axis=1)


if __name__ == "__main__":
    # Small shapes consistent with the module's forward.
    batch, seq, D = 2, 8, 128           # D multiple of 128 -> lane-dense tiles
    gene_vocab, expr_vocab = 64, 16
    cond_vocab, lib_vocab = 8, 8
    max_seq_len, pad_token_id = 16, 0

    key = jax.random.PRNGKey(0)
    ks = jax.random.split(key, 12)

    gene_emb = jax.random.normal(ks[0], (gene_vocab, D), jnp.float32) * 0.02
    expr_emb = jax.random.normal(ks[1], (expr_vocab, D), jnp.float32) * 0.02
    # padding_idx rows are zero (matches nn.Embedding(padding_idx=...) forward behavior).
    gene_emb = gene_emb.at[pad_token_id].set(0.0)
    expr_emb = expr_emb.at[pad_token_id].set(0.0)

    params = {
        "gene_emb": gene_emb,
        "expr_emb": expr_emb,
        # nn.Linear(D, D): torch weight is [out, in]; store the transpose for x @ W^T.
        "proj_gene_w_t": (jax.random.normal(ks[2], (D, D), jnp.float32) * 0.05),
        "proj_gene_b": jax.random.normal(ks[3], (D,), jnp.float32) * 0.05,
        "proj_expr_w_t": (jax.random.normal(ks[4], (D, D), jnp.float32) * 0.05),
        "proj_expr_b": jax.random.normal(ks[5], (D,), jnp.float32) * 0.05,
        "ln_gamma": 1.0 + jax.random.normal(ks[6], (D,), jnp.float32) * 0.05,
        "ln_beta": jax.random.normal(ks[7], (D,), jnp.float32) * 0.05,
        "pos_emb": jax.random.normal(ks[8], (max_seq_len, D), jnp.float32) * 0.02,
        "cond_emb": jax.random.normal(ks[9], (cond_vocab, D), jnp.float32) * 0.02,
        "lib_emb": jax.random.normal(ks[10], (lib_vocab, D), jnp.float32) * 0.02,
    }

    kid = jax.random.split(ks[11], 4)
    gene_ids = jax.random.randint(kid[0], (batch, seq), 0, gene_vocab)
    expression_tokens = jax.random.randint(kid[1], (batch, seq), 0, expr_vocab)
    condition_tokens = jax.random.randint(kid[2], (batch,), 0, cond_vocab)
    library_size = jax.random.randint(kid[3], (batch,), 0, lib_vocab)

    ref = _reference_forward(params, gene_ids, expression_tokens,
                             condition_tokens, library_size)

    # Full-f32 streaming path: must match the reference tightly.
    out32 = token_embedding_forward(params, gene_ids, expression_tokens,
                                    condition_tokens, library_size,
                                    compute_dtype=jnp.float32)
    out32 = jax.block_until_ready(out32)
    assert out32.shape == (batch, seq, D), out32.shape
    err32 = float(jnp.max(jnp.abs(out32 - ref)))
    assert jnp.allclose(out32, ref, atol=1e-4, rtol=1e-4), err32

    # Default bf16-streaming path (f32 accumulate / LN): looser tolerance vs f32 reference.
    out_bf = token_embedding_forward(params, gene_ids, expression_tokens,
                                     condition_tokens, library_size)
    out_bf = jax.block_until_ready(out_bf)
    assert out_bf.shape == (batch, seq, D), out_bf.shape
    err_bf = float(jnp.max(jnp.abs(out_bf - ref)))
    assert jnp.allclose(out_bf, ref, atol=7.5e-2, rtol=7.5e-2), err_bf

    print("KERNEL_OK")
</pallas_src>

<mosaic_0001>
module attributes {stable_mosaic.version = 11 : i64} {
  func.func @_fused_embed_kernel(%arg0: i32, %arg1: i32, %arg2: memref<1x8x128xf32, #tpu.memory_space<vmem>>, %arg3: memref<1x8x128xf32, #tpu.memory_space<vmem>>, %arg4: memref<256x128xf32, #tpu.memory_space<vmem>>, %arg5: memref<1x128xf32, #tpu.memory_space<vmem>>, %arg6: memref<1x128xf32, #tpu.memory_space<vmem>>, %arg7: memref<1x128xf32, #tpu.memory_space<vmem>>, %arg8: memref<8x128xf32, #tpu.memory_space<vmem>>, %arg9: memref<1x1x128xf32, #tpu.memory_space<vmem>>, %arg10: memref<1x8x128xf32, #tpu.memory_space<vmem>>) attributes {dimension_semantics = [#tpu.dimension_semantics<parallel>, #tpu.dimension_semantics<parallel>], iteration_bounds = array<i64: 2, 1>, scalar_prefetch = 0 : i64, scratch_operands = 0 : i64, tpu.core_type = #tpu.core_type<tc>, window_params = [{transform_indices = @transform_0, window_bounds = array<i64: 1, 8, 128>}, {transform_indices = @transform_1, window_bounds = array<i64: 1, 8, 128>}, {pipeline_mode = #tpu.pipeline_mode<synchronous>, transform_indices = @transform_2, window_bounds = array<i64: 256, 128>}, {pipeline_mode = #tpu.pipeline_mode<synchronous>, transform_indices = @transform_3, window_bounds = array<i64: 1, 128>}, {pipeline_mode = #tpu.pipeline_mode<synchronous>, transform_indices = @transform_4, window_bounds = array<i64: 1, 128>}, {pipeline_mode = #tpu.pipeline_mode<synchronous>, transform_indices = @transform_5, window_bounds = array<i64: 1, 128>}, {pipeline_mode = #tpu.pipeline_mode<synchronous>, transform_indices = @transform_6, window_bounds = array<i64: 8, 128>}, {transform_indices = @transform_7, window_bounds = array<i64: 1, 1, 128>}, {transform_indices = @transform_8, window_bounds = array<i64: 1, 8, 128>}]} {
    %c0 = arith.constant 0 : index
    %c0_0 = arith.constant 0 : index
    %c0_1 = arith.constant 0 : index
    %0 = vector.load %arg2[%c0, %c0_0, %c0_1] : memref<1x8x128xf32, #tpu.memory_space<vmem>>, vector<1x8x128xf32>
    %1 = vector.shape_cast %0 : vector<1x8x128xf32> to vector<8x128xf32>
    %c0_2 = arith.constant 0 : index
    %c0_3 = arith.constant 0 : index
    %c0_4 = arith.constant 0 : index
    %2 = vector.load %arg3[%c0_2, %c0_3, %c0_4] : memref<1x8x128xf32, #tpu.memory_space<vmem>>, vector<1x8x128xf32>
    %3 = vector.shape_cast %2 : vector<1x8x128xf32> to vector<8x128xf32>
    %4 = tpu.concatenate %1, %3 in 1 : vector<8x128xf32>, vector<8x128xf32> -> vector<8x256xf32>
    %c0_5 = arith.constant 0 : index
    %c0_6 = arith.constant 0 : index
    %5 = vector.load %arg4[%c0_5, %c0_6] : memref<256x128xf32, #tpu.memory_space<vmem>>, vector<256x128xf32>
    %cst = arith.constant dense<0.000000e+00> : vector<8x128xf32>
    %6 = tpu.matmul %4, %5, %cst {dimension_numbers = #tpu.dot_dimension_numbers<[1], [0], [0], [1], [0, 0, 1, 1], [], []>} : vector<8x256xf32>, vector<256x128xf32>, vector<8x128xf32> -> vector<8x128xf32>
    %c0_7 = arith.constant 0 : index
    %c0_8 = arith.constant 0 : index
    %7 = vector.load %arg5[%c0_7, %c0_8] : memref<1x128xf32, #tpu.memory_space<vmem>>, vector<1x128xf32>
    %8 = vector.broadcast %7 : vector<1x128xf32> to vector<8x128xf32>
    %9 = arith.addf %6, %8 : vector<8x128xf32>
    %cst_9 = arith.constant dense<0.000000e+00> : vector<8xf32>
    %10 = vector.multi_reduction <add>, %9, %cst_9 [1] : vector<8x128xf32> to vector<8xf32>
    %11 = vector.shape_cast %10 : vector<8xf32> to vector<8x1xf32>
    %cst_10 = arith.constant 1.280000e+02 : f32
    %12 = vector.broadcast %cst_10 : f32 to vector<8x1xf32>
    %13 = arith.divf %11, %12 : vector<8x1xf32>
    %14 = vector.broadcast %13 : vector<8x1xf32> to vector<8x128xf32>
    %15 = arith.subf %9, %14 : vector<8x128xf32>
    %16 = arith.mulf %15, %15 : vector<8x128xf32>
    %cst_11 = arith.constant dense<0.000000e+00> : vector<8xf32>
    %17 = vector.multi_reduction <add>, %16, %cst_11 [1] : vector<8x128xf32> to vector<8xf32>
    %18 = vector.shape_cast %17 : vector<8xf32> to vector<8x1xf32>
    %cst_12 = arith.constant 1.280000e+02 : f32
    %19 = vector.broadcast %cst_12 : f32 to vector<8x1xf32>
    %20 = arith.divf %18, %19 : vector<8x1xf32>
    %cst_13 = arith.constant 9.99999974E-6 : f32
    %21 = vector.broadcast %cst_13 : f32 to vector<8x1xf32>
    %22 = arith.addf %20, %21 : vector<8x1xf32>
    %23 = math.rsqrt %22 : vector<8x1xf32>
    %24 = vector.broadcast %23 : vector<8x1xf32> to vector<8x128xf32>
    %25 = arith.mulf %15, %24 : vector<8x128xf32>
    %c0_14 = arith.constant 0 : index
    %c0_15 = arith.constant 0 : index
    %26 = vector.load %arg6[%c0_14, %c0_15] : memref<1x128xf32, #tpu.memory_space<vmem>>, vector<1x128xf32>
    %27 = vector.broadcast %26 : vector<1x128xf32> to vector<8x128xf32>
    %28 = arith.mulf %25, %27 : vector<8x128xf32>
    %c0_16 = arith.constant 0 : index
    %c0_17 = arith.constant 0 : index
    %29 = vector.load %arg7[%c0_16, %c0_17] : memref<1x128xf32, #tpu.memory_space<vmem>>, vector<1x128xf32>
    %30 = vector.broadcast %29 : vector<1x128xf32> to vector<8x128xf32>
    %31 = arith.addf %28, %30 : vector<8x128xf32>
    %c0_18 = arith.constant 0 : index
    %c0_19 = arith.constant 0 : index
    %32 = vector.load %arg8[%c0_18, %c0_19] : memref<8x128xf32, #tpu.memory_space<vmem>>, vector<8x128xf32>
    %33 = arith.addf %31, %32 : vector<8x128xf32>
    %34 = tpu.iota {dimensions = array<i32: 0>} : vector<8x1xi32>
    %c0_i32 = arith.constant 0 : i32
    %35 = vector.broadcast %c0_i32 : i32 to vector<8x1xi32>
    %36 = arith.cmpi eq, %34, %35 : vector<8x1xi32>
    %c0_20 = arith.constant 0 : index
    %c0_21 = arith.constant 0 : index
    %c0_22 = arith.constant 0 : index
    %37 = vector.load %arg9[%c0_20, %c0_21, %c0_22] : memref<1x1x128xf32, #tpu.memory_space<vmem>>, vector<1x1x128xf32>
    %38 = vector.shape_cast %37 : vector<1x1x128xf32> to vector<1x128xf32>
    %cst_23 = arith.constant 0.000000e+00 : f32
    %39 = vector.shape_cast %36 : vector<8x1xi1> to vector<8x1xi1>
    %40 = vector.broadcast %39 : vector<8x1xi1> to vector<8x128xi1>
    %41 = vector.shape_cast %38 : vector<1x128xf32> to vector<1x128xf32>
    %42 = vector.broadcast %41 : vector<1x128xf32> to vector<8x128xf32>
    %43 = vector.broadcast %cst_23 : f32 to vector<8x128xf32>
    %44 = arith.select %40, %42, %43 : vector<8x128xi1>, vector<8x128xf32>
    %45 = arith.addf %33, %44 : vector<8x128xf32>
    %c0_24 = arith.constant 0 : index
    %c0_25 = arith.constant 0 : index
    %c0_26 = arith.constant 0 : index
    %46 = vector.load %arg10[%c0_24, %c0_25, %c0_26] : memref<1x8x128xf32, #tpu.memory_space<vmem>>, vector<1x8x128xf32>
    %47 = vector.shape_cast %46 : vector<1x8x128xf32> to vector<8x128xf32>
    %48 = vector.shape_cast %45 : vector<8x128xf32> to vector<1x8x128xf32>
    tpu.vector_store %arg10[%c0_24, %c0_25, %c0_26], %48 {strides = array<i32>} : memref<1x8x128xf32, #tpu.memory_space<vmem>>, vector<1x8x128xf32>,
    return
  }
  func.func @transform_0(%arg0: i32, %arg1: i32) -> (i32, i32, i32) {
    %c0_i32 = arith.constant 0 : i32
    %c0_i32_0 = arith.constant 0 : i32
    return %arg0, %arg1, %c0_i32 : i32, i32, i32
  }
  func.func @transform_1(%arg0: i32, %arg1: i32) -> (i32, i32, i32) {
    %c0_i32 = arith.constant 0 : i32
    %c0_i32_0 = arith.constant 0 : i32
    return %arg0, %arg1, %c0_i32 : i32, i32, i32
  }
  func.func @transform_2(%arg0: i32, %arg1: i32) -> (i32, i32) {
    %c0_i32 = arith.constant 0 : i32
    %c0_i32_0 = arith.constant 0 : i32
    %c0_i32_1 = arith.constant 0 : i32
    return %c0_i32, %c0_i32_0 : i32, i32
  }
  func.func @transform_3(%arg0: i32, %arg1: i32) -> (i32, i32) {
    %c0_i32 = arith.constant 0 : i32
    %c0_i32_0 = arith.constant 0 : i32
    %c0_i32_1 = arith.constant 0 : i32
    return %c0_i32, %c0_i32_0 : i32, i32
  }
  func.func @transform_4(%arg0: i32, %arg1: i32) -> (i32, i32) {
    %c0_i32 = arith.constant 0 : i32
    %c0_i32_0 = arith.constant 0 : i32
    %c0_i32_1 = arith.constant 0 : i32
    return %c0_i32, %c0_i32_0 : i32, i32
  }
  func.func @transform_5(%arg0: i32, %arg1: i32) -> (i32, i32) {
    %c0_i32 = arith.constant 0 : i32
    %c0_i32_0 = arith.constant 0 : i32
    %c0_i32_1 = arith.constant 0 : i32
    return %c0_i32, %c0_i32_0 : i32, i32
  }
  func.func @transform_6(%arg0: i32, %arg1: i32) -> (i32, i32) {
    %c0_i32 = arith.constant 0 : i32
    %c0_i32_0 = arith.constant 0 : i32
    %c0_i32_1 = arith.constant 0 : i32
    return %c0_i32, %c0_i32_0 : i32, i32
  }
  func.func @transform_7(%arg0: i32, %arg1: i32) -> (i32, i32, i32) {
    %c0_i32 = arith.constant 0 : i32
    %c0_i32_0 = arith.constant 0 : i32
    %c0_i32_1 = arith.constant 0 : i32
    return %arg0, %c0_i32, %c0_i32_0 : i32, i32, i32
  }
  func.func @transform_8(%arg0: i32, %arg1: i32) -> (i32, i32, i32) {
    %c0_i32 = arith.constant 0 : i32
    %c0_i32_0 = arith.constant 0 : i32
    return %arg0, %arg1, %c0_i32 : i32, i32, i32
  }
}

</mosaic_0001>

<llo_original>
// kernel: token_embedding_forward.1
$region0: #{token_embedding_forward.1}
  #allocation0 [shape = 'u32[]', space=smem, size = 0x4, offset = 0x4, fixed_abs, tag = 'smem constant byte address 0x4 - core index']
  #allocation1 [shape = 'u32[144,128]{1,0:T(1,128)}', space=vmem, size = 0x12000, scoped, tag = 'internal scratch']
  %s0 = inlined_call_operand.vmem [shape: f32[2,8,128], index: 0, kind: input, shape index: {}]
  %s1 = inlined_call_operand.vmem [shape: f32[2,8,128], index: 1, kind: input, shape index: {}]
  %s2 = inlined_call_operand.vmem [shape: f32[256,128], index: 2, kind: input, shape index: {}]
  %s3 = inlined_call_operand.vmem [shape: f32[1,128], index: 3, kind: input, shape index: {}]
  %s4 = inlined_call_operand.vmem [shape: f32[1,128], index: 4, kind: input, shape index: {}]
  %s5 = inlined_call_operand.vmem [shape: f32[1,128], index: 5, kind: input, shape index: {}]
  %s6 = inlined_call_operand.vmem [shape: f32[8,128], index: 6, kind: input, shape index: {}]
  %s7 = inlined_call_operand.vmem [shape: f32[2,1,128], index: 7, kind: input, shape index: {}]
  %s8 = inlined_call_operand.hbm [shape: f32[2,8,128], index: 8, kind: output, shape index: {}]
  %s9 = sld [smem:[#allocation0]]
  $region65: #{token_embedding_forward.1} parent=0
    _
  %s11 = ssub.s32 1, %s9
  %s12 = scalar_select 0, %s11, %s9
  $region1: #{token_embedding_forward.1} parent=0
    #allocation2 [shape = 'u8[8192]{0}', space=vmem, size = 0x2000, scoped, tag = 'output window, operand 0']
    #allocation3 [shape = 's32[2]{0}', space=sflag, size = 0x8, scoped, tag = 'scoped memory for token_embedding_forward.1']
    %13 = vsyncpa [#allocation3], 0
    %s14 = scalar_lea.sflag [#allocation3], 1
    %15 = vsyncpa %s14, 0
    loop: start=0, step=1, limit=4
    $region2: #{token_embedding_forward.1} parent=1 // loop_pre_header
      _
    $region3: #{token_embedding_forward.1} parent=1 // loop_header
      %s17 = sphi 0, %s21
      %p18 = scmp.ge.s32.totalorder %s17, 4
      %s24 = sphi 0, %s36
      %s25 = sphi 0, %s32
      %s26 = sphi 0, %s24
      %s27 = sphi 0, %s25
      %s28 = sphi 0, %s26
      %s29 = sphi 0, %s27
      %s41 = sphi 0, %s43
      %s44 = sphi 0, %s41
      %s45 = sphi 0, %s44
      %s61 = sphi 0, %s45
      %s69 = sphi 0, %s71
      %s72 = sphi 0, %s69
      %s73 = sphi 0, %s72
      %s89 = sphi 0, %s73
      %s93 = sphi 0, %s93
      %s95 = sphi 0, %s93
      %s96 = sphi 0, %s95
      %s110 = sphi 0, %s96
      %s114 = sphi 0, %s114
      %s116 = sphi 0, %s114
      %s117 = sphi 0, %s116
      %s131 = sphi 0, %s117
      %s135 = sphi 0, %s135
      %s137 = sphi 0, %s135
      %s138 = sphi 0, %s137
      %s152 = sphi 0, %s138
      %s156 = sphi 0, %s156
      %s158 = sphi 0, %s156
      %s159 = sphi 0, %s158
      %s173 = sphi 0, %s159
      %s177 = sphi 0, %s177
      %s179 = sphi 0, %s177
      %s180 = sphi 0, %s179
      %s194 = sphi 0, %s180
      %s200 = sphi 0, %s202
      %s203 = sphi 0, %s200
      %s204 = sphi 0, %s203
      %s220 = sphi 0, %s204
      %s228 = sphi 0, %s230
      %s231 = sphi 0, %s228
      %s232 = sphi 0, %s231
      %s248 = sphi 0, %s232
    $region4: #{token_embedding_forward.1} parent=1 // loop_header_branch
      %20 = sbr.rel (%p18) target = $region8
    $region5: #{token_embedding_forward.1} parent=1 // loop_body
      %s22 = ssub.s32 %s17, 1
      %s23 = ssub.s32 %s17, 2
      %s30 = sadd.s32 1, %s25
      %p31 = scmp.ge.s32.totalorder %s30, 1
      %s32 = scalar_select %p31, 0, %s30
      %s33 = sadd.s32 1, %s24
      %s34 = scalar_select %p31, %s33, %s24
      %p35 = scmp.ge.s32.totalorder %s34, 2
      %s36 = scalar_select %p35, 0, %s34
      %s37 = ssub.s32 %s24, %s36
      %s38 = ssub.s32 %s25, %s32
      %s39 = sor.u32 %s37, %s38
      %p40 = scmp.eq.s32.totalorder %s39, 0
      %s42 = sadd.s32 %s41, 1
      %s43 = scalar_select %p40, %s41, %s42
      %p46 = pneg %p40
      %p47 = scmp.eq.s32.totalorder %s17, 1
      %p48 = por %p46, %p47
      %p49 = scmp.ne.s32.totalorder %s41, %s44
      %p50 = scmp.eq.s32.totalorder %s17, 0
      %p51 = por %p49, %p50
      %p52 = scmp.ne.s32.totalorder %s41, %s44
      %p53 = scmp.eq.s32.totalorder %s22, 1
      %p54 = por %p52, %p53
      %p55 = scmp.ne.s32.totalorder %s44, %s45
      %p56 = scmp.eq.s32.totalorder %s22, 0
      %p57 = por %p55, %p56
      %p58 = scmp.ne.s32.totalorder %s44, %s45
      %p59 = scmp.eq.s32.totalorder %s23, 1
      %p60 = por %p58, %p59
      %p62 = scmp.ne.s32.totalorder %s45, %s61
      %p63 = scmp.eq.s32.totalorder %s23, 0
      %p64 = por %p62, %p63
      %s65 = ssub.s32 %s24, %s36
      %s66 = ssub.s32 %s25, %s32
      %s67 = sor.u32 %s65, %s66
      %p68 = scmp.eq.s32.totalorder %s67, 0
      %s70 = sadd.s32 %s69, 1
      %s71 = scalar_select %p68, %s69, %s70
      %p74 = pneg %p68
      %p75 = scmp.eq.s32.totalorder %s17, 1
      %p76 = por %p74, %p75
      %p77 = scmp.ne.s32.totalorder %s69, %s72
      %p78 = scmp.eq.s32.totalorder %s17, 0
      %p79 = por %p77, %p78
      %p80 = scmp.ne.s32.totalorder %s69, %s72
      %p81 = scmp.eq.s32.totalorder %s22, 1
      %p82 = por %p80, %p81
      %p83 = scmp.ne.s32.totalorder %s72, %s73
      %p84 = scmp.eq.s32.totalorder %s22, 0
      %p85 = por %p83, %p84
      %p86 = scmp.ne.s32.totalorder %s72, %s73
      %p87 = scmp.eq.s32.totalorder %s23, 1
      %p88 = por %p86, %p87
      %p90 = scmp.ne.s32.totalorder %s73, %s89
      %p91 = scmp.eq.s32.totalorder %s23, 0
      %p92 = por %p90, %p91
      %s94 = sadd.s32 %s93, 1
      %p97 = scmp.eq.s32.totalorder %s17, 1
      %p98 = scmp.ne.s32.totalorder %s93, %s95
      %p99 = scmp.eq.s32.totalorder %s17, 0
      %p100 = por %p98, %p99
      %p101 = scmp.ne.s32.totalorder %s93, %s95
      %p102 = scmp.eq.s32.totalorder %s22, 1
      %p103 = por %p101, %p102
      %p104 = scmp.ne.s32.totalorder %s95, %s96
      %p105 = scmp.eq.s32.totalorder %s22, 0
      %p106 = por %p104, %p105
      %p107 = scmp.ne.s32.totalorder %s95, %s96
      %p108 = scmp.eq.s32.totalorder %s23, 1
      %p109 = por %p107, %p108
      %p111 = scmp.ne.s32.totalorder %s96, %s110
      %p112 = scmp.eq.s32.totalorder %s23, 0
      %p113 = por %p111, %p112
      %s115 = sadd.s32 %s114, 1
      %p118 = scmp.eq.s32.totalorder %s17, 1
      %p119 = scmp.ne.s32.totalorder %s114, %s116
      %p120 = scmp.eq.s32.totalorder %s17, 0
      %p121 = por %p119, %p120
      %p122 = scmp.ne.s32.totalorder %s114, %s116
      %p123 = scmp.eq.s32.totalorder %s22, 1
      %p124 = por %p122, %p123
      %p125 = scmp.ne.s32.totalorder %s116, %s117
      %p126 = scmp.eq.s32.totalorder %s22, 0
      %p127 = por %p125, %p126
      %p128 = scmp.ne.s32.totalorder %s116, %s117
      %p129 = scmp.eq.s32.totalorder %s23, 1
      %p130 = por %p128, %p129
      %p132 = scmp.ne.s32.totalorder %s117, %s131
      %p133 = scmp.eq.s32.totalorder %s23, 0
      %p134 = por %p132, %p133
      %s136 = sadd.s32 %s135, 1
      %p139 = scmp.eq.s32.totalorder %s17, 1
      %p140 = scmp.ne.s32.totalorder %s135, %s137
      %p141 = scmp.eq.s32.totalorder %s17, 0
      %p142 = por %p140, %p141
      %p143 = scmp.ne.s32.totalorder %s135, %s137
      %p144 = scmp.eq.s32.totalorder %s22, 1
      %p145 = por %p143, %p144
      %p146 = scmp.ne.s32.totalorder %s137, %s138
      %p147 = scmp.eq.s32.totalorder %s22, 0
      %p148 = por %p146, %p147
      %p149 = scmp.ne.s32.totalorder %s137, %s138
      %p150 = scmp.eq.s32.totalorder %s23, 1
      %p151 = por %p149, %p150
      %p153 = scmp.ne.s32.totalorder %s138, %s152
      %p154 = scmp.eq.s32.totalorder %s23, 0
      %p155 = por %p153, %p154
      %s157 = sadd.s32 %s156, 1
      %p160 = scmp.eq.s32.totalorder %s17, 1
      %p161 = scmp.ne.s32.totalorder %s156, %s158
      %p162 = scmp.eq.s32.totalorder %s17, 0
      %p163 = por %p161, %p162
      %p164 = scmp.ne.s32.totalorder %s156, %s158
      %p165 = scmp.eq.s32.totalorder %s22, 1
      %p166 = por %p164, %p165
      %p167 = scmp.ne.s32.totalorder %s158, %s159
      %p168 = scmp.eq.s32.totalorder %s22, 0
      %p169 = por %p167, %p168
      %p170 = scmp.ne.s32.totalorder %s158, %s159
      %p171 = scmp.eq.s32.totalorder %s23, 1
      %p172 = por %p170, %p171
      %p174 = scmp.ne.s32.totalorder %s159, %s173
      %p175 = scmp.eq.s32.totalorder %s23, 0
      %p176 = por %p174, %p175
      %s178 = sadd.s32 %s177, 1
      %p181 = scmp.eq.s32.totalorder %s17, 1
      %p182 = scmp.ne.s32.totalorder %s177, %s179
      %p183 = scmp.eq.s32.totalorder %s17, 0
      %p184 = por %p182, %p183
      %p185 = scmp.ne.s32.totalorder %s177, %s179
      %p186 = scmp.eq.s32.totalorder %s22, 1
      %p187 = por %p185, %p186
      %p188 = scmp.ne.s32.totalorder %s179, %s180
      %p189 = scmp.eq.s32.totalorder %s22, 0
      %p190 = por %p188, %p189
      %p191 = scmp.ne.s32.totalorder %s179, %s180
      %p192 = scmp.eq.s32.totalorder %s23, 1
      %p193 = por %p191, %p192
      %p195 = scmp.ne.s32.totalorder %s180, %s194
      %p196 = scmp.eq.s32.totalorder %s23, 0
      %p197 = por %p195, %p196
      %s198 = ssub.s32 %s24, %s36
      %p199 = scmp.eq.s32.totalorder %s198, 0
      %s201 = sadd.s32 %s200, 1
      %s202 = scalar_select %p199, %s200, %s201
      %p205 = pneg %p199
      %p206 = scmp.eq.s32.totalorder %s17, 1
      %p207 = por %p205, %p206
      %p208 = scmp.ne.s32.totalorder %s200, %s203
      %p209 = scmp.eq.s32.totalorder %s17, 0
      %p210 = por %p208, %p209
      %p211 = scmp.ne.s32.totalorder %s200, %s203
      %p212 = scmp.eq.s32.totalorder %s22, 1
      %p213 = por %p211, %p212
      %p214 = scmp.ne.s32.totalorder %s203, %s204
      %p215 = scmp.eq.s32.totalorder %s22, 0
      %p216 = por %p214, %p215
      %p217 = scmp.ne.s32.totalorder %s203, %s204
      %p218 = scmp.eq.s32.totalorder %s23, 1
      %p219 = por %p217, %p218
      %p221 = scmp.ne.s32.totalorder %s204, %s220
      %p222 = scmp.eq.s32.totalorder %s23, 0
      %p223 = por %p221, %p222
      %s224 = ssub.s32 %s24, %s36
      %s225 = ssub.s32 %s25, %s32
      %s226 = sor.u32 %s224, %s225
      %p227 = scmp.eq.s32.totalorder %s226, 0
      %s229 = sadd.s32 %s228, 1
      %s230 = scalar_select %p227, %s228, %s229
      %p233 = pneg %p227
      %p234 = scmp.eq.s32.totalorder %s17, 1
      %p235 = por %p233, %p234
      %p236 = scmp.ne.s32.totalorder %s228, %s231
      %p237 = scmp.eq.s32.totalorder %s17, 0
      %p238 = por %p236, %p237
      %p239 = scmp.ne.s32.totalorder %s228, %s231
      %p240 = scmp.eq.s32.totalorder %s22, 1
      %p241 = por %p239, %p240
      %p242 = scmp.ne.s32.totalorder %s231, %s232
      %p243 = scmp.eq.s32.totalorder %s22, 0
      %p244 = por %p242, %p243
      %p245 = scmp.ne.s32.totalorder %s231, %s232
      %p246 = scmp.eq.s32.totalorder %s23, 1
      %p247 = por %p245, %p246
      %p249 = scmp.ne.s32.totalorder %s232, %s248
      %p250 = scmp.eq.s32.totalorder %s23, 0
      %p251 = por %p249, %p250
      %p252 = scmp.le.s32.totalorder 1, %s17
      %p253 = scmp.lt.s32.totalorder %s17, 3
      %p254 = pnand %p252, %p253
      %p255 = pneg %p254
      // Predicated region
      $region9: #{token_embedding_forward.1} parent=5 // pred_check
        _
      $region10: #{token_embedding_forward.1} parent=5 // pred_check_branch
        %257 = sbr.rel (%p254) target = $region12
      $region11: #{token_embedding_forward.1} parent=5 // pred_region
        %s258 = ssub.s32 %s17, 1
        // Predicated region
        $region13: #{token_embedding_forward.1} parent=11 // pred_check
          %p259 = pneg %p106
        $region14: #{token_embedding_forward.1} parent=11 // pred_check_branch
          %261 = sbr.rel (%p259) target = $region16
        $region15: #{token_embedding_forward.1} parent=11 // pred_region
          _
        $region16: #{token_embedding_forward.1} parent=11 // pred_fallthru
          _
        // Predicated region
        $region17: #{token_embedding_forward.1} parent=11 // pred_check
          %p262 = pneg %p127
        $region18: #{token_embedding_forward.1} parent=11 // pred_check_branch
          %264 = sbr.rel (%p262) target = $region20
        $region19: #{token_embedding_forward.1} parent=11 // pred_region
          _
        $region20: #{token_embedding_forward.1} parent=11 // pred_fallthru
          _
        // Predicated region
        $region21: #{token_embedding_forward.1} parent=11 // pred_check
          %p265 = pneg %p148
        $region22: #{token_embedding_forward.1} parent=11 // pred_check_branch
          %267 = sbr.rel (%p265) target = $region24
        $region23: #{token_embedding_forward.1} parent=11 // pred_region
          _
        $region24: #{token_embedding_forward.1} parent=11 // pred_fallthru
          _
        // Predicated region
        $region25: #{token_embedding_forward.1} parent=11 // pred_check
          %p268 = pneg %p169
        $region26: #{token_embedding_forward.1} parent=11 // pred_check_branch
          %270 = sbr.rel (%p268) target = $region28
        $region27: #{token_embedding_forward.1} parent=11 // pred_region
          _
        $region28: #{token_embedding_forward.1} parent=11 // pred_fallthru
          _
        // Predicated region
        $region29: #{token_embedding_forward.1} parent=11 // pred_check
          %p271 = pneg %p190
        $region30: #{token_embedding_forward.1} parent=11 // pred_check_branch
          %273 = sbr.rel (%p271) target = $region32
        $region31: #{token_embedding_forward.1} parent=11 // pred_region
          _
        $region32: #{token_embedding_forward.1} parent=11 // pred_fallthru
          _
      $region12: #{token_embedding_forward.1} parent=5 // pred_fallthru
        _
      %p274 = scmp.lt.s32.totalorder %s17, 2
      // Predicated region
      $region33: #{token_embedding_forward.1} parent=5 // pred_check
        %p275 = pneg %p274
      $region34: #{token_embedding_forward.1} parent=5 // pred_check_branch
        %277 = sbr.rel (%p275) target = $region36
      $region35: #{token_embedding_forward.1} parent=5 // pred_region
        // Predicated region
        $region37: #{token_embedding_forward.1} parent=35 // pred_check
          %p278 = pneg %p51
        $region38: #{token_embedding_forward.1} parent=35 // pred_check_branch
          %280 = sbr.rel (%p278) target = $region40
        $region39: #{token_embedding_forward.1} parent=35 // pred_region
          %p281 = scmp.lt.s32.totalorder %s24, 1
          %s282 = scalar_select %p281, %s24, 1
          %p283 = scmp.lt.s32.totalorder %s25, 0
          %s284 = scalar_select %p283, %s25, 0
          %s285 = sadd.s32 %s284, %s282
          %s286 = smul.addr %s285, 8
          %s287 = scalar_lea.vmem %s0, %s286
        $region40: #{token_embedding_forward.1} parent=35 // pred_fallthru
          _
        // Predicated region
        $region41: #{token_embedding_forward.1} parent=35 // pred_check
          %p288 = pneg %p79
        $region42: #{token_embedding_forward.1} parent=35 // pred_check_branch
          %290 = sbr.rel (%p288) target = $region44
        $region43: #{token_embedding_forward.1} parent=35 // pred_region
          %p291 = scmp.lt.s32.totalorder %s24, 1
          %s292 = scalar_select %p291, %s24, 1
          %p293 = scmp.lt.s32.totalorder %s25, 0
          %s294 = scalar_select %p293, %s25, 0
          %s295 = sadd.s32 %s294, %s292
          %s296 = smul.addr %s295, 8
          %s297 = scalar_lea.vmem %s1, %s296
        $region44: #{token_embedding_forward.1} parent=35 // pred_fallthru
          _
        // Predicated region
        $region45: #{token_embedding_forward.1} parent=35 // pred_check
          %p298 = pneg %p210
        $region46: #{token_embedding_forward.1} parent=35 // pred_check_branch
          %300 = sbr.rel (%p298) target = $region48
        $region47: #{token_embedding_forward.1} parent=35 // pred_region
          %p301 = scmp.lt.s32.totalorder %s24, 1
          %s302 = scalar_select %p301, %s24, 1
          %s303 = scalar_lea.vmem %s7, %s302
        $region48: #{token_embedding_forward.1} parent=35 // pred_fallthru
          _
      $region36: #{token_embedding_forward.1} parent=5 // pred_fallthru
        _
      %p304 = scmp.le.s32.totalorder 1, %s17
      %p305 = scmp.lt.s32.totalorder %s17, 3
      %p306 = pnand %p304, %p305
      %p307 = pneg %p306
      // Predicated region
      $region49: #{token_embedding_forward.1} parent=5 // pred_check
        _
      $region50: #{token_embedding_forward.1} parent=5 // pred_check_branch
        %309 = sbr.rel (%p306) target = $region52
      $region51: #{token_embedding_forward.1} parent=5 // pred_region
        %s310 = ssub.s32 %s17, 1
        %p311 = scmp.lt.s32.totalorder %s26, 1
        %s312 = scalar_select %p311, %s26, 1
        %p313 = scmp.lt.s32.totalorder %s27, 0
        %s314 = scalar_select %p313, %s27, 0
        %s315 = sadd.s32 %s314, %s312
        %s316 = smul.addr %s315, 8
        %s317 = scalar_lea.vmem %s0, %s316
        %p318 = pneg %p57
        %p319 = pneg %p54
        %p320 = scmp.lt.s32.totalorder %s26, 1
        %s321 = scalar_select %p320, %s26, 1
        %p322 = scmp.lt.s32.totalorder %s27, 0
        %s323 = scalar_select %p322, %s27, 0
        %s324 = sadd.s32 %s323, %s321
        %s325 = smul.addr %s324, 8
        %s326 = scalar_lea.vmem %s1, %s325
        %p327 = pneg %p85
        %p328 = pneg %p82
        %p329 = pneg %p106
        %p330 = pneg %p103
        %p331 = pneg %p127
        %p332 = pneg %p124
        %p333 = pneg %p148
        %p334 = pneg %p145
        %p335 = pneg %p169
        %p336 = pneg %p166
        %p337 = pneg %p190
        %p338 = pneg %p187
        %p339 = scmp.lt.s32.totalorder %s26, 1
        %s340 = scalar_select %p339, %s26, 1
        %s341 = scalar_lea.vmem %s7, %s340
        %p342 = pneg %p216
        %p343 = pneg %p213
        %p344 = pneg %p244
        %p345 = pneg %p241
        %s346 = sand.u32 %s231, 1
        %s347 = scalar_lea.sflag [#allocation3], %s346
        %s348 = sand.u32 %s231, 1
        %s349 = smul.addr %s348, 8
        %s350 = scalar_lea.vmem [#allocation2], %s349
        %p351 = scmp.lt.s32.totalorder %s26, 1
        %s352 = scalar_select %p351, %s26, 1
        %p353 = scmp.lt.s32.totalorder %s27, 0
        %s354 = scalar_select %p353, %s27, 0
        %s355 = sadd.s32 %s354, %s352
        %s356 = smul.addr %s355, 8
        %s357 = scalar_lea.vmem %s0, %s356
        %p358 = scmp.lt.s32.totalorder %s26, 1
        %s359 = scalar_select %p358, %s26, 1
        %p360 = scmp.lt.s32.totalorder %s27, 0
        %s361 = scalar_select %p360, %s27, 0
        %s362 = sadd.s32 %s361, %s359
        %s363 = smul.addr %s362, 8
        %s364 = scalar_lea.vmem %s1, %s363
        %p365 = scmp.lt.s32.totalorder %s26, 1
        %s366 = scalar_select %p365, %s26, 1
        %s367 = scalar_lea.vmem %s7, %s366
        %v368 = vld [vmem:[%s357] sm:$0xff]
        %v369 = vld [vmem:[%s364] sm:$0xff]
        %v370 = vld [vmem:[%s2] sm:$0xff]
        %v371 = vld [vmem:[%s2 + $0x8] sm:$0xff]
        %v372 = vld [vmem:[%s2 + $0x10] sm:$0xff]
        %v373 = vld [vmem:[%s2 + $0x18] sm:$0xff]
        %v374 = vld [vmem:[%s2 + $0x20] sm:$0xff]
        %v375 = vld [vmem:[%s2 + $0x28] sm:$0xff]
        %v376 = vld [vmem:[%s2 + $0x30] sm:$0xff]
        %v377 = vld [vmem:[%s2 + $0x38] sm:$0xff]
        %v378 = vld [vmem:[%s2 + $0x40] sm:$0xff]
        %v379 = vld [vmem:[%s2 + $0x48] sm:$0xff]
        %v380 = vld [vmem:[%s2 + $0x50] sm:$0xff]
        %v381 = vld [vmem:[%s2 + $0x58] sm:$0xff]
        %v382 = vld [vmem:[%s2 + $0x60] sm:$0xff]
        %v383 = vld [vmem:[%s2 + $0x68] sm:$0xff]
        %v384 = vld [vmem:[%s2 + $0x70] sm:$0xff]
        %v385 = vld [vmem:[%s2 + $0x78] sm:$0xff]
        %v386 = vld [vmem:[%s2 + $0x80] sm:$0xff]
        %v387 = vld [vmem:[%s2 + $0x88] sm:$0xff]
        %v388 = vld [vmem:[%s2 + $0x90] sm:$0xff]
        %v389 = vld [vmem:[%s2 + $0x98] sm:$0xff]
        %v390 = vld [vmem:[%s2 + $0xa0] sm:$0xff]
        %v391 = vld [vmem:[%s2 + $0xa8] sm:$0xff]
        %v392 = vld [vmem:[%s2 + $0xb0] sm:$0xff]
        %v393 = vld [vmem:[%s2 + $0xb8] sm:$0xff]
        %v394 = vld [vmem:[%s2 + $0xc0] sm:$0xff]
        %v395 = vld [vmem:[%s2 + $0xc8] sm:$0xff]
        %v396 = vld [vmem:[%s2 + $0xd0] sm:$0xff]
        %v397 = vld [vmem:[%s2 + $0xd8] sm:$0xff]
        %v398 = vld [vmem:[%s2 + $0xe0] sm:$0xff]
        %v399 = vld [vmem:[%s2 + $0xe8] sm:$0xff]
        %v400 = vld [vmem:[%s2 + $0xf0] sm:$0xff]
        %v401 = vld [vmem:[%s2 + $0xf8] sm:$0xff]
        %v402 = vld [vmem:[%s3] sm:$0x1]
        %v404 = vlaneseq
        %v405 = vshrl.u32 %v404, 7
        %v406 = vsub.s32 0, %v405
        %v407 = vrot.slane %v402, %v406
        %409 = vmatprep.subr.mxu0 0.0
        %410 = vmatpush1.msra.mxu0 %v385
        %411 = vmatprep.subr.mxu0 0.0
        %412 = vmatpush1.msra.mxu0 %v384
        %413 = vmatprep.subr.mxu0 0.0
        %414 = vmatpush1.msra.mxu0 %v383
        %415 = vmatprep.subr.mxu0 0.0
        %416 = vmatpush1.msra.mxu0 %v382
        %417 = vmatprep.subr.mxu0 0.0
        %418 = vmatpush1.msra.mxu0 %v381
        %419 = vmatprep.subr.mxu0 0.0
        %420 = vmatpush1.msra.mxu0 %v380
        %421 = vmatprep.subr.mxu0 0.0
        %422 = vmatpush1.msra.mxu0 %v379
        %423 = vmatprep.subr.mxu0 0.0
        %424 = vmatpush1.msra.mxu0 %v378
        %425 = vmatprep.subr.mxu0 0.0
        %426 = vmatpush1.msra.mxu0 %v377
        %427 = vmatprep.subr.mxu0 0.0
        %428 = vmatpush1.msra.mxu0 %v376
        %429 = vmatprep.subr.mxu0 0.0
        %430 = vmatpush1.msra.mxu0 %v375
        %431 = vmatprep.subr.mxu0 0.0
        %432 = vmatpush1.msra.mxu0 %v374
        %433 = vmatprep.subr.mxu0 0.0
        %434 = vmatpush1.msra.mxu0 %v373
        %435 = vmatprep.subr.mxu0 0.0
        %436 = vmatpush1.msra.mxu0 %v372
        %437 = vmatprep.subr.mxu0 0.0
        %438 = vmatpush1.msra.mxu0 %v371
        %439 = vmatprep.subr.mxu0 0.0
        %440 = vmatpush1.msra.mxu0 %v370
        %441 = vmatprep.subr.mxu0 0.0
        %442 = vmatpush2.msra.mxu0 %v401
        %443 = vmatprep.subr.mxu0 0.0
        %444 = vmatpush2.msra.mxu0 %v400
        %445 = vmatprep.subr.mxu0 0.0
        %446 = vmatpush2.msra.mxu0 %v399
        %447 = vmatprep.subr.mxu0 0.0
        %448 = vmatpush2.msra.mxu0 %v398
        %449 = vmatprep.subr.mxu0 0.0
        %450 = vmatpush2.msra.mxu0 %v397
        %451 = vmatprep.subr.mxu0 0.0
        %452 = vmatpush2.msra.mxu0 %v396
        %453 = vmatprep.subr.mxu0 0.0
        %454 = vmatpush2.msra.mxu0 %v395
        %455 = vmatprep.subr.mxu0 0.0
        %456 = vmatpush2.msra.mxu0 %v394
        %457 = vmatprep.subr.mxu0 0.0
        %458 = vmatpush2.msra.mxu0 %v393
        %459 = vmatprep.subr.mxu0 0.0
        %460 = vmatpush2.msra.mxu0 %v392
        %461 = vmatprep.subr.mxu0 0.0
        %462 = vmatpush2.msra.mxu0 %v391
        %463 = vmatprep.subr.mxu0 0.0
        %464 = vmatpush2.msra.mxu0 %v390
        %465 = vmatprep.subr.mxu0 0.0
        %466 = vmatpush2.msra.mxu0 %v389
        %467 = vmatprep.subr.mxu0 0.0
        %468 = vmatpush2.msra.mxu0 %v388
        %469 = vmatprep.subr.mxu0 0.0
        %470 = vmatpush2.msra.mxu0 %v387
        %471 = vmatprep.subr.mxu0 0.0
        %472 = vmatpush2.msra.mxu0 %v386
        %473 = vmatprep.mubr.f32.mxu0 %v369
        %474 = vmatmul.mubr.f32.gmra.mxu0 %v368
        %v475 = vpop.f32.mrf.mxu0
        %v476 = vadd.f32 %v407, %v475
        %v477 = vpop.f32.mrf.mxu0
        %478 = vdwg.mxu0
        %479 = vadd.xlane.f32.xlu0 %v476
        %v480 = vpop.xlane.xlu0 %479
        %v481 = vrcp.pop 128.0
        %v482 = vmul.f32 %v480, %v481
        %v483 = vsub.f32 %v476, %v482
        %v484 = vmul.f32 %v483, %v483
        %485 = vadd.xlane.f32.xlu0 %v484
        %v486 = vpop.xlane.xlu0 %485
        %v487 = vmul.f32 %v486, %v481
        %v488 = vadd.f32 %v487, 1e-05
        %v489 = vrsqrt.pop %v488
        %v490 = vmul.f32 %v483, %v489
        %v491 = vld [vmem:[%s4] sm:$0x1]
        %v493 = vlaneseq
        %v494 = vshrl.u32 %v493, 7
        %v495 = vsub.s32 0, %v494
        %v496 = vrot.slane %v491, %v495
        %v498 = vmul.f32 %v490, %v496
        %v499 = vld [vmem:[%s5] sm:$0x1]
        %v501 = vlaneseq
        %v502 = vshrl.u32 %v501, 7
        %v503 = vsub.s32 0, %v502
        %v504 = vrot.slane %v499, %v503
        %v506 = vadd.f32 %v498, %v504
        %v507 = vld [vmem:[%s6] sm:$0xff]
        %v508 = vadd.f32 %v506, %v507
        %v509 = vlaneseq
        %v510 = vshrl.u32 %v509, 7
        %vm511 = vcmp.eq.s32.totalorder %v510, 0
        %v512 = vld [vmem:[%s367] sm:$0x1]
        %v513 = vsel %vm511, 1, 0
        %vm514 = vcmp.eq.s32.totalorder %v513, 1
        %v516 = vlaneseq
        %v517 = vshrl.u32 %v516, 7
        %v518 = vsub.s32 0, %v517
        %v519 = vrot.slane %v512, %v518
        %v521 = vsel %vm514, %v519, 0.0
        %v522 = vadd.f32 %v508, %v521
        %523 = vst [vmem:[%s350] sm:$0xff] %v522
        %s524 = sand.u32 %s231, 1
        %s525 = scalar_lea.sflag [#allocation3], %s524
        %s526 = sand.u32 %s231, 1
        %s527 = smul.addr %s526, 8
        %s528 = scalar_lea.vmem [#allocation2], %s527
        // Predicated region
        $region53: #{token_embedding_forward.1} parent=51 // pred_check
          %p529 = pneg %p241
        $region54: #{token_embedding_forward.1} parent=51 // pred_check_branch
          %531 = sbr.rel (%p529) target = $region56
        $region55: #{token_embedding_forward.1} parent=51 // pred_region
          %s533 = ssub.s32 128, 128
          %534 = vsyncadd %s525, %s533
          %s535 = sadd.s32 %s27, %s26
          %s536 = smul.addr %s535, 128
          %s537 = scalar_lea.hbm %s8, %s536
          %s539 = sshll.u32 %s528, 4
          %s540 = int_to_ptr.vmem [resolvable:$true] %s539
          %542 = dma.vmem_to_hbm [thread:$0]  %s540, 128, %s537, %s525
        $region56: #{token_embedding_forward.1} parent=51 // pred_fallthru
          _
      $region52: #{token_embedding_forward.1} parent=5 // pred_fallthru
        _
      %p543 = scmp.le.s32.totalorder 2, %s17
      // Predicated region
      $region57: #{token_embedding_forward.1} parent=5 // pred_check
        %p544 = pneg %p543
      $region58: #{token_embedding_forward.1} parent=5 // pred_check_branch
        %546 = sbr.rel (%p544) target = $region60
      $region59: #{token_embedding_forward.1} parent=5 // pred_region
        %s547 = ssub.s32 %s17, 2
        // Predicated region
        $region61: #{token_embedding_forward.1} parent=59 // pred_check
          %p548 = pneg %p247
        $region62: #{token_embedding_forward.1} parent=59 // pred_check_branch
          %550 = sbr.rel (%p548) target = $region64
        $region63: #{token_embedding_forward.1} parent=59 // pred_region
          %s551 = sand.u32 %s232, 1
          %s552 = scalar_lea.sflag [#allocation3], %s551
          %s553 = sand.u32 %s232, 1
          %s554 = smul.addr %s553, 8
          %s555 = scalar_lea.vmem [#allocation2], %s554
          %556 = dma.done %s552, 128
        $region64: #{token_embedding_forward.1} parent=59 // pred_fallthru
          _
      $region60: #{token_embedding_forward.1} parent=5 // pred_fallthru
        _
    $region6: #{token_embedding_forward.1} parent=1 // loop_footer
      %s21 = sadd.s32 1, %s17
    $region7: #{token_embedding_forward.1} parent=1 // loop_footer_branch
      %16 = sbr.rel target = $region3
    $region8: #{token_embedding_forward.1} parent=1 // loop_exit
      _
    %557 = vsyncpa [#allocation3], 1
    %s558 = scalar_lea.sflag [#allocation3], 1
    %559 = vsyncpa %s558, 1

</llo_original>
